<compile_context>
chip_gen: v7x
topology: tpu7x:2x2x1
jax: 0.10.0
libtpu: 0.0.40
codegen_flags: <defaults>
</compile_context>

<pallas_src>
import functools

import jax
import jax.numpy as jnp
from jax import lax
from jax.experimental import pallas as pl
from jax.experimental.pallas import tpu as pltpu

LANES = 128
MAX_TILE_ROWS = 2048   # 2048 x 128 f32 = 1 MiB per input tile
NUM_SHARDS = 2         # megacore split (v7x); negligible overhead elsewhere


def _simmax_kernel(x_ref, w_ref, o_ref, acc_ref, *,
                   margin, inv_count, n_elems, tile_rows, inner_tiles):
    shard = pl.program_id(0)
    step = pl.program_id(1)

    @pl.when(step == 0)
    def _init():
        acc_ref[...] = jnp.zeros_like(acc_ref)

    x = x_ref[...].astype(jnp.float32)
    w = w_ref[...].astype(jnp.float32)
    if margin != 0.0:                      # trace-time branch: skip add if margin == 0
        x = x + jnp.float32(margin)
    contrib = jnp.log(x) * w               # (tile_rows, LANES) f32

    tile_elems = tile_rows * LANES
    tile_idx = shard * inner_tiles + step  # logical (unclamped) tile id
    tile_start = tile_idx * tile_elems
    is_full = tile_start + tile_elems <= n_elems

    @pl.when(is_full)
    def _full_tile():
        acc_ref[...] += jnp.sum(contrib, axis=0, keepdims=True)

    @pl.when(jnp.logical_not(is_full))
    def _partial_tile():
        # Mask out padded lanes / out-of-bounds rows / phantom (clamped) tiles.
        row_ids = lax.broadcasted_iota(jnp.int32, contrib.shape, 0)
        col_ids = lax.broadcasted_iota(jnp.int32, contrib.shape, 1)
        flat_idx = tile_start + row_ids * LANES + col_ids
        masked = jnp.where(flat_idx < n_elems, contrib, jnp.float32(0.0))
        acc_ref[...] += jnp.sum(masked, axis=0, keepdims=True)

    @pl.when(step == pl.num_programs(1) - 1)
    def _finalize():
        # Per-lane, already-negated and scaled partials; cross-lane + cross-shard
        # reduction happens in the wrapper (tiny: NUM_SHARDS * 128 values).
        o_ref[...] = (-(acc_ref[...] * inv_count)).reshape(1, 1, LANES)


def sim_max_loss(x, weights, margin=0.0):
    """Pallas TPU implementation of SimMaxLoss.forward. Returns a f32 scalar."""
    assert x.shape == weights.shape, "x and weights must have the same shape"
    n_elems = int(x.size)

    x_flat = jnp.ravel(x)          # native dtype: f32 cast happens inside the kernel
    w_flat = jnp.ravel(weights)

    # Only pad (by < 128 elements) when the flat size isn't a lane multiple so the
    # (rows, 128) view exists; pad values are irrelevant (tail is masked in-kernel).
    pad = (-n_elems) % LANES
    if pad:
        x_flat = jnp.pad(x_flat, (0, pad))
        w_flat = jnp.pad(w_flat, (0, pad))

    rows = (n_elems + pad) // LANES
    x2d = x_flat.reshape(rows, LANES)
    w2d = w_flat.reshape(rows, LANES)

    if rows >= MAX_TILE_ROWS:
        tile_rows = MAX_TILE_ROWS
    else:
        tile_rows = max(8, (rows // 8) * 8)
    total_tiles = pl.cdiv(rows, tile_rows)
    inner_tiles = pl.cdiv(total_tiles, NUM_SHARDS)

    def in_idx(s, i):
        # Clamp so a shard's trailing phantom tiles re-read the last real tile
        # (their contribution is masked to zero inside the kernel).
        return (jnp.minimum(s * inner_tiles + i, total_tiles - 1), 0)

    kernel = functools.partial(
        _simmax_kernel,
        margin=float(margin),
        inv_count=1.0 / float(n_elems),
        n_elems=n_elems,
        tile_rows=tile_rows,
        inner_tiles=inner_tiles,
    )

    partials = pl.pallas_call(
        kernel,
        out_shape=jax.ShapeDtypeStruct((NUM_SHARDS, 1, LANES), jnp.float32),
        grid_spec=pltpu.PrefetchScalarGridSpec(
            num_scalar_prefetch=0,
            grid=(NUM_SHARDS, inner_tiles),
            in_specs=[
                pl.BlockSpec((tile_rows, LANES), in_idx),
                pl.BlockSpec((tile_rows, LANES), in_idx),
            ],
            out_specs=pl.BlockSpec((1, 1, LANES), lambda s, i: (s, 0, 0)),
            scratch_shapes=[pltpu.VMEM((1, LANES), jnp.float32)],
        ),
        compiler_params=pltpu.CompilerParams(
            dimension_semantics=("parallel", "arbitrary"),
            vmem_limit_bytes=32 * 1024 * 1024,
        ),
        cost_estimate=pl.CostEstimate(
            flops=2 * n_elems,
            transcendentals=n_elems,
            bytes_accessed=x.size * x.dtype.itemsize
            + weights.size * weights.dtype.itemsize
            + NUM_SHARDS * LANES * 4,
        ),
    )(x2d, w2d)

    # Final tiny reduction over shards and lanes.
    return jnp.sum(partials)


if __name__ == "__main__":
    key = jax.random.PRNGKey(0)
    kx, kw = jax.random.split(key)

    # CLIP-style similarity map, NCHW. x must be positive (as in the original use).
    shape = (2, 4, 16, 16)
    x = jax.random.uniform(kx, shape, jnp.float32, minval=0.05, maxval=1.0)
    weights = jax.random.uniform(kw, shape, jnp.float32, minval=0.0, maxval=2.0)
    margin = 0.0

    loss = sim_max_loss(x, weights, margin=margin)
    loss = jax.block_until_ready(loss)
    ref = -jnp.mean(jnp.log(x + margin) * weights)
    assert jnp.allclose(loss, ref, rtol=1e-5, atol=1e-5), (loss, ref)

    # Ragged shape (not a multiple of 128) + non-zero margin: exercises the
    # in-kernel tail mask, the partial-tile path, and both shards.
    shape2 = (3, 7, 64)
    x2 = jax.random.uniform(kx, shape2, jnp.float32, minval=0.05, maxval=1.0)
    w2 = jax.random.uniform(kw, shape2, jnp.float32, minval=0.0, maxval=2.0)
    loss2 = jax.block_until_ready(sim_max_loss(x2, w2, margin=0.25))
    ref2 = -jnp.mean(jnp.log(x2 + 0.25) * w2)
    assert jnp.allclose(loss2, ref2, rtol=1e-5, atol=1e-5), (loss2, ref2)

    print("KERNEL_OK")
</pallas_src>

<mosaic_0001>
module attributes {stable_mosaic.version = 11 : i64} {
  func.func @_simmax_kernel(%arg0: i32, %arg1: i32, %arg2: memref<16x128xf32, #tpu.memory_space<vmem>>, %arg3: memref<16x128xf32, #tpu.memory_space<vmem>>, %arg4: memref<1x1x128xf32, #tpu.memory_space<vmem>>, %arg5: memref<1x128xf32, #tpu.memory_space<vmem>>) attributes {dimension_semantics = [#tpu.dimension_semantics<parallel>, #tpu.dimension_semantics<arbitrary>], iteration_bounds = array<i64: 2, 1>, scalar_prefetch = 0 : i64, scratch_operands = 1 : i64, tpu.core_type = #tpu.core_type<tc>, window_params = [{transform_indices = @transform_0, window_bounds = array<i64: 16, 128>}, {transform_indices = @transform_1, window_bounds = array<i64: 16, 128>}, {transform_indices = @transform_2, window_bounds = array<i64: 1, 1, 128>}]} {
    %c0_i32 = arith.constant 0 : i32
    %0 = arith.cmpi eq, %arg1, %c0_i32 : i32
    %1 = arith.extui %0 : i1 to i32
    %c0_i32_0 = arith.constant 0 : i32
    %2 = arith.cmpi ne, %1, %c0_i32_0 : i32
    scf.if %2 {
      %cst = arith.constant 0.000000e+00 : f32
      %20 = vector.broadcast %cst : f32 to vector<1x128xf32>
      %c0_10 = arith.constant 0 : index
      %c0_11 = arith.constant 0 : index
      %21 = vector.load %arg5[%c0_10, %c0_11] : memref<1x128xf32, #tpu.memory_space<vmem>>, vector<1x128xf32>
      tpu.vector_store %arg5[%c0_10, %c0_11], %20 {strides = array<i32>} : memref<1x128xf32, #tpu.memory_space<vmem>>, vector<1x128xf32>,
    } else {
    }
    %c0 = arith.constant 0 : index
    %c0_1 = arith.constant 0 : index
    %3 = vector.load %arg2[%c0, %c0_1] : memref<16x128xf32, #tpu.memory_space<vmem>>, vector<16x128xf32>
    %c0_2 = arith.constant 0 : index
    %c0_3 = arith.constant 0 : index
    %4 = vector.load %arg3[%c0_2, %c0_3] : memref<16x128xf32, #tpu.memory_space<vmem>>, vector<16x128xf32>
    %5 = math.log %3 : vector<16x128xf32>
    %6 = arith.mulf %5, %4 : vector<16x128xf32>
    %c1_i32 = arith.constant 1 : i32
    %7 = arith.muli %arg0, %c1_i32 : i32
    %8 = arith.addi %7, %arg1 : i32
    %c2048_i32 = arith.constant 2048 : i32
    %9 = arith.muli %8, %c2048_i32 : i32
    %c2048_i32_4 = arith.constant 2048 : i32
    %10 = arith.addi %9, %c2048_i32_4 : i32
    %c2048_i32_5 = arith.constant 2048 : i32
    %11 = arith.cmpi sle, %10, %c2048_i32_5 : i32
    %12 = arith.extui %11 : i1 to i32
    %c0_i32_6 = arith.constant 0 : i32
    %13 = arith.cmpi ne, %12, %c0_i32_6 : i32
    scf.if %13 {
      %c0_10 = arith.constant 0 : index
      %c0_11 = arith.constant 0 : index
      %20 = vector.load %arg5[%c0_10, %c0_11] : memref<1x128xf32, #tpu.memory_space<vmem>>, vector<1x128xf32>
      %cst = arith.constant dense<0.000000e+00> : vector<128xf32>
      %21 = vector.multi_reduction <add>, %6, %cst [0] : vector<16x128xf32> to vector<128xf32>
      %22 = vector.shape_cast %21 : vector<128xf32> to vector<1x128xf32>
      %23 = arith.addf %20, %22 : vector<1x128xf32>
      %c0_12 = arith.constant 0 : index
      %c0_13 = arith.constant 0 : index
      %24 = vector.load %arg5[%c0_12, %c0_13] : memref<1x128xf32, #tpu.memory_space<vmem>>, vector<1x128xf32>
      tpu.vector_store %arg5[%c0_12, %c0_13], %23 {strides = array<i32>} : memref<1x128xf32, #tpu.memory_space<vmem>>, vector<1x128xf32>,
    } else {
    }
    %true = arith.constant true
    %14 = arith.xori %11, %true : i1
    %15 = arith.extui %14 : i1 to i32
    %c0_i32_7 = arith.constant 0 : i32
    %16 = arith.cmpi ne, %15, %c0_i32_7 : i32
    scf.if %16 {
      %20 = tpu.iota {dimensions = array<i32: 0>} : vector<16x128xi32>
      %21 = tpu.iota {dimensions = array<i32: 1>} : vector<16x128xi32>
      %c128_i32 = arith.constant 128 : i32
      %22 = vector.broadcast %c128_i32 : i32 to vector<16x128xi32>
      %23 = arith.muli %20, %22 : vector<16x128xi32>
      %24 = vector.broadcast %9 : i32 to vector<16x128xi32>
      %25 = arith.addi %24, %23 : vector<16x128xi32>
      %26 = arith.addi %25, %21 : vector<16x128xi32>
      %c2048_i32_10 = arith.constant 2048 : i32
      %27 = vector.broadcast %c2048_i32_10 : i32 to vector<16x128xi32>
      %28 = arith.cmpi slt, %26, %27 : vector<16x128xi32>
      %cst = arith.constant 0.000000e+00 : f32
      %29 = vector.broadcast %cst : f32 to vector<16x128xf32>
      %30 = arith.select %28, %6, %29 : vector<16x128xi1>, vector<16x128xf32>
      %c0_11 = arith.constant 0 : index
      %c0_12 = arith.constant 0 : index
      %31 = vector.load %arg5[%c0_11, %c0_12] : memref<1x128xf32, #tpu.memory_space<vmem>>, vector<1x128xf32>
      %cst_13 = arith.constant dense<0.000000e+00> : vector<128xf32>
      %32 = vector.multi_reduction <add>, %30, %cst_13 [0] : vector<16x128xf32> to vector<128xf32>
      %33 = vector.shape_cast %32 : vector<128xf32> to vector<1x128xf32>
      %34 = arith.addf %31, %33 : vector<1x128xf32>
      %c0_14 = arith.constant 0 : index
      %c0_15 = arith.constant 0 : index
      %35 = vector.load %arg5[%c0_14, %c0_15] : memref<1x128xf32, #tpu.memory_space<vmem>>, vector<1x128xf32>
      tpu.vector_store %arg5[%c0_14, %c0_15], %34 {strides = array<i32>} : memref<1x128xf32, #tpu.memory_space<vmem>>, vector<1x128xf32>,
    } else {
    }
    %c0_i32_8 = arith.constant 0 : i32
    %17 = arith.cmpi eq, %arg1, %c0_i32_8 : i32
    %18 = arith.extui %17 : i1 to i32
    %c0_i32_9 = arith.constant 0 : i32
    %19 = arith.cmpi ne, %18, %c0_i32_9 : i32
    scf.if %19 {
      %c0_10 = arith.constant 0 : index
      %c0_11 = arith.constant 0 : index
      %20 = vector.load %arg5[%c0_10, %c0_11] : memref<1x128xf32, #tpu.memory_space<vmem>>, vector<1x128xf32>
      %cst = arith.constant 4.8828125E-4 : f32
      %21 = vector.broadcast %cst : f32 to vector<1x128xf32>
      %22 = arith.mulf %20, %21 : vector<1x128xf32>
      %cst_12 = arith.constant 0.000000e+00 : f32
      %23 = vector.broadcast %cst_12 : f32 to vector<1x128xf32>
      %24 = arith.subf %23, %22 : vector<1x128xf32>
      %25 = vector.shape_cast %24 : vector<1x128xf32> to vector<1x1x128xf32>
      %c0_13 = arith.constant 0 : index
      %c0_14 = arith.constant 0 : index
      %c0_15 = arith.constant 0 : index
      %26 = vector.load %arg4[%c0_13, %c0_14, %c0_15] : memref<1x1x128xf32, #tpu.memory_space<vmem>>, vector<1x1x128xf32>
      tpu.vector_store %arg4[%c0_13, %c0_14, %c0_15], %25 {strides = array<i32>} : memref<1x1x128xf32, #tpu.memory_space<vmem>>, vector<1x1x128xf32>,
    } else {
    }
    return
  }
  func.func @transform_0(%arg0: i32, %arg1: i32) -> (i32, i32) {
    %c1_i32 = arith.constant 1 : i32
    %0 = arith.muli %arg0, %c1_i32 : i32
    %1 = arith.addi %0, %arg1 : i32
    %c0_i32 = arith.constant 0 : i32
    %2 = arith.minsi %1, %c0_i32 : i32
    %c0_i32_0 = arith.constant 0 : i32
    %c0_i32_1 = arith.constant 0 : i32
    return %2, %c0_i32_0 : i32, i32
  }
  func.func @transform_1(%arg0: i32, %arg1: i32) -> (i32, i32) {
    %c1_i32 = arith.constant 1 : i32
    %0 = arith.muli %arg0, %c1_i32 : i32
    %1 = arith.addi %0, %arg1 : i32
    %c0_i32 = arith.constant 0 : i32
    %2 = arith.minsi %1, %c0_i32 : i32
    %c0_i32_0 = arith.constant 0 : i32
    %c0_i32_1 = arith.constant 0 : i32
    return %2, %c0_i32_0 : i32, i32
  }
  func.func @transform_2(%arg0: i32, %arg1: i32) -> (i32, i32, i32) {
    %c0_i32 = arith.constant 0 : i32
    %c0_i32_0 = arith.constant 0 : i32
    %c0_i32_1 = arith.constant 0 : i32
    return %arg0, %c0_i32, %c0_i32_0 : i32, i32, i32
  }
}

</mosaic_0001>

<llo_original>
// kernel: tpu_custom_call.1
$region0: #{tpu_custom_call.1}
  #allocation0 [shape = 'u32[]', space=smem, size = 0x4, offset = 0x4, fixed_abs, tag = 'smem constant byte address 0x4 - core index']
  #allocation1 [shape = 'u32[144,128]{1,0:T(1,128)}', space=vmem, size = 0x12000, scoped, tag = 'internal scratch']
  #allocation2 [shape = 'f32[1,128]{1,0:T(1,128)}', space=vmem, size = 0x200, scoped, tag = 'scratch operand']
  %s0 = inlined_call_operand.hbm [shape: f32[16,128], index: 0, kind: input, shape index: {}]
  %s1 = inlined_call_operand.hbm [shape: f32[16,128], index: 1, kind: input, shape index: {}]
  %s2 = inlined_call_operand.hbm [shape: f32[2,1,128], index: 2, kind: output, shape index: {}]
  %s3 = sld [smem:[#allocation0]]
  $region65: #{tpu_custom_call.1} parent=0
    _
  %s5 = ssub.s32 1, %s3
  %s6 = scalar_select 0, %s5, %s3
  $region1: #{tpu_custom_call.1} parent=0
    #allocation3 [shape = 'u8[16384]{0}', space=vmem, size = 0x4000, scoped, tag = 'input window, operand 0']
    #allocation4 [shape = 's32[2]{0}', space=sflag, size = 0x8, scoped, tag = 'scoped memory for tpu_custom_call.1']
    #allocation5 [shape = 's32[2]{0}', space=sflag, size = 0x8, scoped, tag = 'scoped memory for tpu_custom_call.1']
    #allocation6 [shape = 'u8[16384]{0}', space=vmem, size = 0x4000, scoped, tag = 'input window, operand 1']
    #allocation7 [shape = 's32[2]{0}', space=sflag, size = 0x8, scoped, tag = 'scoped memory for tpu_custom_call.1']
    #allocation8 [shape = 'u8[1024]{0}', space=vmem, size = 0x400, scoped, tag = 'output window, operand 0']
    %7 = vsyncpa [#allocation4], 0
    %s8 = scalar_lea.sflag [#allocation4], 1
    %9 = vsyncpa %s8, 0
    %10 = vsyncpa [#allocation7], 0
    %s11 = scalar_lea.sflag [#allocation7], 1
    %12 = vsyncpa %s11, 0
    %13 = vsyncpa [#allocation5], 0
    %s14 = scalar_lea.sflag [#allocation5], 1
    %15 = vsyncpa %s14, 0
    loop: start=0, step=1, limit=4
    $region2: #{tpu_custom_call.1} parent=1 // loop_pre_header
      _
    $region3: #{tpu_custom_call.1} parent=1 // loop_header
      %s17 = sphi 0, %s21
      %p18 = scmp.ge.s32.totalorder %s17, 4
      %s24 = sphi 0, %s36
      %s25 = sphi 0, %s32
      %s26 = sphi 0, %s24
      %s27 = sphi 0, %s25
      %s28 = sphi 0, %s26
      %s29 = sphi 0, %s27
      %s45 = sphi 0, %s47
      %s48 = sphi 0, %s45
      %s49 = sphi 0, %s48
      %s65 = sphi 0, %s49
      %s77 = sphi 0, %s79
      %s80 = sphi 0, %s77
      %s81 = sphi 0, %s80
      %s97 = sphi 0, %s81
      %s103 = sphi 0, %s105
      %s106 = sphi 0, %s103
      %s107 = sphi 0, %s106
      %s123 = sphi 0, %s107
    $region4: #{tpu_custom_call.1} parent=1 // loop_header_branch
      %20 = sbr.rel (%p18) target = $region8
    $region5: #{tpu_custom_call.1} parent=1 // loop_body
      %s22 = ssub.s32 %s17, 1
      %s23 = ssub.s32 %s17, 2
      %s30 = sadd.s32 1, %s25
      %p31 = scmp.ge.s32.totalorder %s30, 1
      %s32 = scalar_select %p31, 0, %s30
      %s33 = sadd.s32 1, %s24
      %s34 = scalar_select %p31, %s33, %s24
      %p35 = scmp.ge.s32.totalorder %s34, 2
      %s36 = scalar_select %p35, 0, %s34
      %s37 = sadd.s32 %s24, %s25
      %p38 = scmp.lt.s32.totalorder %s37, 0
      %s39 = scalar_select %p38, %s37, 0
      %s40 = sadd.s32 %s36, %s32
      %p41 = scmp.lt.s32.totalorder %s40, 0
      %s42 = scalar_select %p41, %s40, 0
      %s43 = ssub.s32 %s39, %s42
      %p44 = scmp.eq.s32.totalorder %s43, 0
      %s46 = sadd.s32 %s45, 1
      %s47 = scalar_select %p44, %s45, %s46
      %p50 = pneg %p44
      %p51 = scmp.eq.s32.totalorder %s17, 1
      %p52 = por %p50, %p51
      %p53 = scmp.ne.s32.totalorder %s45, %s48
      %p54 = scmp.eq.s32.totalorder %s17, 0
      %p55 = por %p53, %p54
      %p56 = scmp.ne.s32.totalorder %s45, %s48
      %p57 = scmp.eq.s32.totalorder %s22, 1
      %p58 = por %p56, %p57
      %p59 = scmp.ne.s32.totalorder %s48, %s49
      %p60 = scmp.eq.s32.totalorder %s22, 0
      %p61 = por %p59, %p60
      %p62 = scmp.ne.s32.totalorder %s48, %s49
      %p63 = scmp.eq.s32.totalorder %s23, 1
      %p64 = por %p62, %p63
      %p66 = scmp.ne.s32.totalorder %s49, %s65
      %p67 = scmp.eq.s32.totalorder %s23, 0
      %p68 = por %p66, %p67
      %s69 = sadd.s32 %s24, %s25
      %p70 = scmp.lt.s32.totalorder %s69, 0
      %s71 = scalar_select %p70, %s69, 0
      %s72 = sadd.s32 %s36, %s32
      %p73 = scmp.lt.s32.totalorder %s72, 0
      %s74 = scalar_select %p73, %s72, 0
      %s75 = ssub.s32 %s71, %s74
      %p76 = scmp.eq.s32.totalorder %s75, 0
      %s78 = sadd.s32 %s77, 1
      %s79 = scalar_select %p76, %s77, %s78
      %p82 = pneg %p76
      %p83 = scmp.eq.s32.totalorder %s17, 1
      %p84 = por %p82, %p83
      %p85 = scmp.ne.s32.totalorder %s77, %s80
      %p86 = scmp.eq.s32.totalorder %s17, 0
      %p87 = por %p85, %p86
      %p88 = scmp.ne.s32.totalorder %s77, %s80
      %p89 = scmp.eq.s32.totalorder %s22, 1
      %p90 = por %p88, %p89
      %p91 = scmp.ne.s32.totalorder %s80, %s81
      %p92 = scmp.eq.s32.totalorder %s22, 0
      %p93 = por %p91, %p92
      %p94 = scmp.ne.s32.totalorder %s80, %s81
      %p95 = scmp.eq.s32.totalorder %s23, 1
      %p96 = por %p94, %p95
      %p98 = scmp.ne.s32.totalorder %s81, %s97
      %p99 = scmp.eq.s32.totalorder %s23, 0
      %p100 = por %p98, %p99
      %s101 = ssub.s32 %s24, %s36
      %p102 = scmp.eq.s32.totalorder %s101, 0
      %s104 = sadd.s32 %s103, 1
      %s105 = scalar_select %p102, %s103, %s104
      %p108 = pneg %p102
      %p109 = scmp.eq.s32.totalorder %s17, 1
      %p110 = por %p108, %p109
      %p111 = scmp.ne.s32.totalorder %s103, %s106
      %p112 = scmp.eq.s32.totalorder %s17, 0
      %p113 = por %p111, %p112
      %p114 = scmp.ne.s32.totalorder %s103, %s106
      %p115 = scmp.eq.s32.totalorder %s22, 1
      %p116 = por %p114, %p115
      %p117 = scmp.ne.s32.totalorder %s106, %s107
      %p118 = scmp.eq.s32.totalorder %s22, 0
      %p119 = por %p117, %p118
      %p120 = scmp.ne.s32.totalorder %s106, %s107
      %p121 = scmp.eq.s32.totalorder %s23, 1
      %p122 = por %p120, %p121
      %p124 = scmp.ne.s32.totalorder %s107, %s123
      %p125 = scmp.eq.s32.totalorder %s23, 0
      %p126 = por %p124, %p125
      %p127 = scmp.le.s32.totalorder 1, %s17
      %p128 = scmp.lt.s32.totalorder %s17, 3
      %p129 = pnand %p127, %p128
      %p130 = pneg %p129
      // Predicated region
      $region9: #{tpu_custom_call.1} parent=5 // pred_check
        _
      $region10: #{tpu_custom_call.1} parent=5 // pred_check_branch
        %132 = sbr.rel (%p129) target = $region12
      $region11: #{tpu_custom_call.1} parent=5 // pred_region
        %s133 = ssub.s32 %s17, 1
      $region12: #{tpu_custom_call.1} parent=5 // pred_fallthru
        _
      %p134 = scmp.lt.s32.totalorder %s17, 2
      // Predicated region
      $region13: #{tpu_custom_call.1} parent=5 // pred_check
        %p135 = pneg %p134
      $region14: #{tpu_custom_call.1} parent=5 // pred_check_branch
        %137 = sbr.rel (%p135) target = $region16
      $region15: #{tpu_custom_call.1} parent=5 // pred_region
        // Predicated region
        $region17: #{tpu_custom_call.1} parent=15 // pred_check
          %p138 = pneg %p55
        $region18: #{tpu_custom_call.1} parent=15 // pred_check_branch
          %140 = sbr.rel (%p138) target = $region20
        $region19: #{tpu_custom_call.1} parent=15 // pred_region
          %s141 = sand.u32 %s45, 1
          %s142 = scalar_lea.sflag [#allocation4], %s141
          %s143 = sand.u32 %s45, 1
          %s144 = smul.addr %s143, 16
          %s145 = scalar_lea.vmem [#allocation3], %s144
          %s146 = sadd.s32 %s24, %s25
          %p147 = scmp.lt.s32.totalorder %s146, 0
          %s148 = scalar_select %p147, %s146, 0
          %s149 = smul.u32 2, %s148
          %s151 = ssub.s32 256, 256
          %152 = vsyncadd %s142, %s151
          %s153 = smul.addr %s149, 128
          %s154 = scalar_lea.hbm %s0, %s153
          %s155 = sshll.u32 %s145, 4
          %s156 = int_to_ptr.vmem [resolvable:$true] %s155
          %161 = dma.hbm_to_vmem [thread:$0]  %s154, 256, %s156, %s142, 128, 128, 8
        $region20: #{tpu_custom_call.1} parent=15 // pred_fallthru
          _
        // Predicated region
        $region21: #{tpu_custom_call.1} parent=15 // pred_check
          %p162 = pneg %p87
        $region22: #{tpu_custom_call.1} parent=15 // pred_check_branch
          %164 = sbr.rel (%p162) target = $region24
        $region23: #{tpu_custom_call.1} parent=15 // pred_region
          %s165 = sand.u32 %s77, 1
          %s166 = scalar_lea.sflag [#allocation7], %s165
          %s167 = sand.u32 %s77, 1
          %s168 = smul.addr %s167, 16
          %s169 = scalar_lea.vmem [#allocation6], %s168
          %s170 = sadd.s32 %s24, %s25
          %p171 = scmp.lt.s32.totalorder %s170, 0
          %s172 = scalar_select %p171, %s170, 0
          %s173 = smul.u32 2, %s172
          %s175 = ssub.s32 256, 256
          %176 = vsyncadd %s166, %s175
          %s177 = smul.addr %s173, 128
          %s178 = scalar_lea.hbm %s1, %s177
          %s179 = sshll.u32 %s169, 4
          %s180 = int_to_ptr.vmem [resolvable:$true] %s179
          %185 = dma.hbm_to_vmem [thread:$0]  %s178, 256, %s180, %s166, 128, 128, 8
        $region24: #{tpu_custom_call.1} parent=15 // pred_fallthru
          _
      $region16: #{tpu_custom_call.1} parent=5 // pred_fallthru
        _
      %p186 = scmp.le.s32.totalorder 1, %s17
      %p187 = scmp.lt.s32.totalorder %s17, 3
      %p188 = pnand %p186, %p187
      %p189 = pneg %p188
      // Predicated region
      $region25: #{tpu_custom_call.1} parent=5 // pred_check
        _
      $region26: #{tpu_custom_call.1} parent=5 // pred_check_branch
        %191 = sbr.rel (%p188) target = $region28
      $region27: #{tpu_custom_call.1} parent=5 // pred_region
        %s192 = ssub.s32 %s17, 1
        %s193 = sand.u32 %s48, 1
        %s194 = scalar_lea.sflag [#allocation4], %s193
        %s195 = sand.u32 %s48, 1
        %s196 = smul.addr %s195, 16
        %s197 = scalar_lea.vmem [#allocation3], %s196
        // Predicated region
        $region29: #{tpu_custom_call.1} parent=27 // pred_check
          %p198 = pneg %p61
        $region30: #{tpu_custom_call.1} parent=27 // pred_check_branch
          %200 = sbr.rel (%p198) target = $region32
        $region31: #{tpu_custom_call.1} parent=27 // pred_region
          %201 = dma.done %s194, 256
        $region32: #{tpu_custom_call.1} parent=27 // pred_fallthru
          _
        %s202 = sand.u32 %s80, 1
        %s203 = scalar_lea.sflag [#allocation7], %s202
        %s204 = sand.u32 %s80, 1
        %s205 = smul.addr %s204, 16
        %s206 = scalar_lea.vmem [#allocation6], %s205
        // Predicated region
        $region33: #{tpu_custom_call.1} parent=27 // pred_check
          %p207 = pneg %p93
        $region34: #{tpu_custom_call.1} parent=27 // pred_check_branch
          %209 = sbr.rel (%p207) target = $region36
        $region35: #{tpu_custom_call.1} parent=27 // pred_region
          %210 = dma.done %s203, 256
        $region36: #{tpu_custom_call.1} parent=27 // pred_fallthru
          _
        %s211 = sand.u32 %s48, 1
        %s212 = scalar_lea.sflag [#allocation4], %s211
        %s213 = sand.u32 %s48, 1
        %s214 = smul.addr %s213, 16
        %s215 = scalar_lea.vmem [#allocation3], %s214
        %p216 = pneg %p61
        %p217 = pneg %p58
        %s218 = sand.u32 %s80, 1
        %s219 = scalar_lea.sflag [#allocation7], %s218
        %s220 = sand.u32 %s80, 1
        %s221 = smul.addr %s220, 16
        %s222 = scalar_lea.vmem [#allocation6], %s221
        %p223 = pneg %p93
        %p224 = pneg %p90
        %p225 = pneg %p119
        %p226 = pneg %p116
        %s227 = sand.u32 %s106, 1
        %s228 = scalar_lea.sflag [#allocation5], %s227
        %s229 = sand.u32 %s106, 1
        %s230 = scalar_lea.vmem [#allocation8], %s229
        %s231 = sadd.s32 %s26, %s27
        %p232 = scmp.lt.s32.totalorder %s231, 0
        %s233 = scalar_select %p232, %s231, 0
        %s234 = smul.u32 2, %s233
        %s235 = sadd.s32 %s26, %s27
        %p236 = scmp.lt.s32.totalorder %s235, 0
        %s237 = scalar_select %p236, %s235, 0
        %s238 = smul.u32 2, %s237
        %p239 = scmp.eq.s32.totalorder %s27, 0
        // Predicated region
        $region37: #{tpu_custom_call.1} parent=27 // pred_check
          %p240 = pneg %p239
        $region38: #{tpu_custom_call.1} parent=27 // pred_check_branch
          %242 = sbr.rel (%p240) target = $region40
        $region39: #{tpu_custom_call.1} parent=27 // pred_region
          %243 = vst [vmem:[#allocation2] sm:$0x1] 0.0
        $region40: #{tpu_custom_call.1} parent=27 // pred_fallthru
          _
        %v244 = vld [vmem:[%s197] sm:$0xff]
        %v245 = vld [vmem:[%s197 + $0x8] sm:$0xff]
        %v246 = vld [vmem:[%s206] sm:$0xff]
        %v247 = vld [vmem:[%s206 + $0x8] sm:$0xff]
        %v248 = vlog2.pop %v244
        %v249 = vmul.f32 %v248, 0.6931472
        %v250 = vlog2.pop %v245
        %v251 = vmul.f32 %v250, 0.6931472
        %v252 = vmul.f32 %v249, %v246
        %v253 = vmul.f32 %v251, %v247
        %s254 = sadd.s32 %s26, %s27
        %s255 = smul.u32 %s254, 2048
        %s256 = sadd.s32 %s255, 2048
        %p257 = scmp.le.s32.totalorder %s256, 2048
        // Predicated region
        $region41: #{tpu_custom_call.1} parent=27 // pred_check
          %p258 = pneg %p257
        $region42: #{tpu_custom_call.1} parent=27 // pred_check_branch
          %260 = sbr.rel (%p258) target = $region44
        $region43: #{tpu_custom_call.1} parent=27 // pred_region
          %v261 = vld [vmem:[#allocation2] sm:$0x1]
          %v262 = vadd.f32 %v252, %v253
          %v263 = vrot.slane %v262, 4
          %v264 = vadd.f32 %v262, %v263
          %v265 = vrot.slane %v264, 2
          %v266 = vadd.f32 %v264, %v265
          %v267 = vrot.slane %v266, 1
          %v268 = vadd.f32 %v266, %v267
          %v269 = vadd.f32 %v261, %v268
          %270 = vst [vmem:[#allocation2] sm:$0x1] %v269
        $region44: #{tpu_custom_call.1} parent=27 // pred_fallthru
          _
        %p271 = scmp.gt.s32.totalorder %s256, 2048
        // Predicated region
        $region45: #{tpu_custom_call.1} parent=27 // pred_check
          %p272 = pneg %p271
        $region46: #{tpu_custom_call.1} parent=27 // pred_check_branch
          %274 = sbr.rel (%p272) target = $region48
        $region47: #{tpu_custom_call.1} parent=27 // pred_region
          %v275 = vlaneseq
          %v276 = vshrl.u32 %v275, 7
          %v277 = vadd.s32 %v276, 8
          %v278 = vlaneseq
          %v279 = vand.u32 %v278, 127
          %v280 = vmul.u32 %v276, 128
          %v281 = vmul.u32 %v277, 128
          %v282 = vstv %s255
          %v283 = vadd.s32 %v282, %v280
          %v284 = vadd.s32 %v282, %v281
          %v285 = vadd.s32 %v283, %v279
          %v286 = vadd.s32 %v284, %v279
          %vm287 = vcmp.lt.s32.totalorder %v285, 2048
          %vm288 = vcmp.lt.s32.totalorder %v286, 2048
          %v289 = vsel %vm287, %v252, 0.0
          %v290 = vsel %vm288, %v253, 0.0
          %v291 = vld [vmem:[#allocation2] sm:$0x1]
          %v292 = vadd.f32 %v289, %v290
          %v293 = vrot.slane %v292, 4
          %v294 = vadd.f32 %v292, %v293
          %v295 = vrot.slane %v294, 2
          %v296 = vadd.f32 %v294, %v295
          %v297 = vrot.slane %v296, 1
          %v298 = vadd.f32 %v296, %v297
          %v299 = vadd.f32 %v291, %v298
          %300 = vst [vmem:[#allocation2] sm:$0x1] %v299
        $region48: #{tpu_custom_call.1} parent=27 // pred_fallthru
          _
        // Predicated region
        $region49: #{tpu_custom_call.1} parent=27 // pred_check
          %p301 = pneg %p239
        $region50: #{tpu_custom_call.1} parent=27 // pred_check_branch
          %303 = sbr.rel (%p301) target = $region52
        $region51: #{tpu_custom_call.1} parent=27 // pred_region
          %v304 = vld [vmem:[#allocation2] sm:$0x1]
          %v305 = vmul.f32 %v304, 0.00048828125
          %v306 = vsub.f32 0.0, %v305
          %307 = vst [vmem:[%s230] sm:$0x1] %v306
        $region52: #{tpu_custom_call.1} parent=27 // pred_fallthru
          _
        %s308 = sand.u32 %s106, 1
        %s309 = scalar_lea.sflag [#allocation5], %s308
        %s310 = sand.u32 %s106, 1
        %s311 = scalar_lea.vmem [#allocation8], %s310
        // Predicated region
        $region53: #{tpu_custom_call.1} parent=27 // pred_check
          %p312 = pneg %p116
        $region54: #{tpu_custom_call.1} parent=27 // pred_check_branch
          %314 = sbr.rel (%p312) target = $region56
        $region55: #{tpu_custom_call.1} parent=27 // pred_region
          %s316 = ssub.s32 16, 16
          %317 = vsyncadd %s309, %s316
          %s318 = smul.addr %s26, 16
          %s319 = scalar_lea.hbm %s2, %s318
          %s321 = sshll.u32 %s311, 4
          %s322 = int_to_ptr.vmem [resolvable:$true] %s321
          %324 = dma.vmem_to_hbm [thread:$0]  %s322, 16, %s319, %s309
        $region56: #{tpu_custom_call.1} parent=27 // pred_fallthru
          _
      $region28: #{tpu_custom_call.1} parent=5 // pred_fallthru
        _
      %p325 = scmp.le.s32.totalorder 2, %s17
      // Predicated region
      $region57: #{tpu_custom_call.1} parent=5 // pred_check
        %p326 = pneg %p325
      $region58: #{tpu_custom_call.1} parent=5 // pred_check_branch
        %328 = sbr.rel (%p326) target = $region60
      $region59: #{tpu_custom_call.1} parent=5 // pred_region
        %s329 = ssub.s32 %s17, 2
        // Predicated region
        $region61: #{tpu_custom_call.1} parent=59 // pred_check
          %p330 = pneg %p122
        $region62: #{tpu_custom_call.1} parent=59 // pred_check_branch
          %332 = sbr.rel (%p330) target = $region64
        $region63: #{tpu_custom_call.1} parent=59 // pred_region
          %s333 = sand.u32 %s107, 1
          %s334 = scalar_lea.sflag [#allocation5], %s333
          %s335 = sand.u32 %s107, 1
          %s336 = scalar_lea.vmem [#allocation8], %s335
          %337 = dma.done %s334, 16
        $region64: #{tpu_custom_call.1} parent=59 // pred_fallthru
          _
      $region60: #{tpu_custom_call.1} parent=5 // pred_fallthru
        _
    $region6: #{tpu_custom_call.1} parent=1 // loop_footer
      %s21 = sadd.s32 1, %s17
    $region7: #{tpu_custom_call.1} parent=1 // loop_footer_branch
      %16 = sbr.rel target = $region3
    $region8: #{tpu_custom_call.1} parent=1 // loop_exit
      _
    %338 = vsyncpa [#allocation4], 1
    %s339 = scalar_lea.sflag [#allocation4], 1
    %340 = vsyncpa %s339, 1
    %341 = vsyncpa [#allocation7], 1
    %s342 = scalar_lea.sflag [#allocation7], 1
    %343 = vsyncpa %s342, 1
    %344 = vsyncpa [#allocation5], 1
    %s345 = scalar_lea.sflag [#allocation5], 1
    %346 = vsyncpa %s345, 1

</llo_original>
